<compile_context>
chip_gen: v6e
topology: v6e:2x2x1
jax: 0.10.0
libtpu: 0.0.40
codegen_flags: <defaults>
</compile_context>

<pallas_src>
import functools

import jax
import jax.numpy as jnp
from jax.experimental import pallas as pl
from jax.experimental.pallas import tpu as pltpu


def _pow_int_or_generic(x, gamma):
    """x**gamma. Small integer gammas -> explicit VPU multiplies (the single
    EUP port is already busy with exp/log); otherwise fall back to jnp.power."""
    g = float(gamma)
    if g == int(g) and 0 <= int(g) <= 4:
        gi = int(g)
        if gi == 0:
            return jnp.ones_like(x)
        out = x
        for _ in range(gi - 1):
            out = out * x
        return out
    return jnp.power(x, jnp.float32(g))


def _per_sample_loss(x, tgt, valid, *, gamma, alpha):
    """Focal loss per sample.

    x:     (C, T) f32 logits   (classes on sublanes, samples on lanes)
    tgt:   (1, T) int32 class indices
    valid: (1, T) bool or None (False on padded tail columns)
    returns (1, T) f32 loss, zeroed where invalid.
    """
    # log-sum-exp gather: only the target-class log-probability is needed, so
    # never materialize the full softmax or an N x C divide.
    m = jnp.max(x, axis=0, keepdims=True)                     # (1, T)
    s = jnp.sum(jnp.exp(x - m), axis=0, keepdims=True)        # (1, T)
    cls = jax.lax.broadcasted_iota(jnp.int32, x.shape, 0)     # class id per row
    onehot = (cls == tgt).astype(jnp.float32)                 # (C, T)
    x_t = jnp.sum(x * onehot, axis=0, keepdims=True)          # target logit
    log_p = (x_t - m) - jnp.log(s)                            # log softmax @ target
    prob = jnp.exp(log_p)
    loss = (-alpha) * _pow_int_or_generic(1.0 - prob, gamma) * log_p
    if valid is not None:
        loss = jnp.where(valid, loss, 0.0)
    return loss


def _tail_mask(i, tile_n, n_rows):
    """(1, tile_n) bool validity mask, or None when N divides evenly."""
    if n_rows % tile_n == 0:
        return None
    lane = jax.lax.broadcasted_iota(jnp.int32, (1, tile_n), 1)
    return (i * tile_n + lane) < n_rows


def _focal_reduce_kernel(pred_ref, tgt_ref, out_ref, acc_ref, *,
                         gamma, alpha, n_rows, tile_n, mean):
    i = pl.program_id(0)

    @pl.when(i == 0)
    def _init():
        acc_ref[...] = jnp.zeros_like(acc_ref)

    x = pred_ref[...].astype(jnp.float32)                     # (C, T)
    tgt = tgt_ref[...]                                        # (1, T)
    valid = _tail_mask(i, tile_n, n_rows)

    loss = _per_sample_loss(x, tgt, valid, gamma=gamma, alpha=alpha)
    acc_ref[...] += loss                                      # lane-wise accumulate

    @pl.when(i == pl.num_programs(0) - 1)
    def _finalize():
        total = jnp.sum(acc_ref[...])                         # single XLU reduce
        if mean:  # static python bool, resolved at trace time
            total = total / jnp.float32(n_rows)
        out_ref[0, 0] = total


def _focal_none_kernel(pred_ref, tgt_ref, out_ref, *, gamma, alpha, n_rows, tile_n):
    i = pl.program_id(0)
    x = pred_ref[...].astype(jnp.float32)                     # (C, T)
    tgt = tgt_ref[...]                                        # (1, T)
    valid = _tail_mask(i, tile_n, n_rows)
    out_ref[...] = _per_sample_loss(x, tgt, valid, gamma=gamma, alpha=alpha)


def _pick_tile(n, c, itemsize):
    # Keep one logits block <= ~4 MiB so double-buffered inputs + target tile
    # stay far below even v7x's 64 MiB physical / 32 MiB default-scoped VMEM.
    budget = 4 * 1024 * 1024
    t = budget // max(1, c * itemsize)
    t = max(128, min(4096, (t // 128) * 128))
    if n <= t:
        return n          # single block == full array dims (no 128 constraint)
    return t


def multi_ce_focal_loss(predict, target, *, gamma=2.0, alpha=0.25,
                        reduction="mean", tile_n=None):
    """Pallas TPU implementation of MultiCEFocalLoss.forward.

    predict: (N, C) logits (C == the module's n_batch / one_hot width)
    target:  (N,)   integer class indices
    """
    n, c = predict.shape
    if alpha is None:
        alpha = 1.0

    # Lane-dense presentation: samples on the 128-lane axis, classes on
    # sublanes (wrapper-side layout plumbing; the kernel streams it in tiles).
    pred_t = jnp.transpose(predict)                     # (C, N), native dtype
    tgt_row = target.reshape(1, n).astype(jnp.int32)    # (1, N)

    itemsize = jnp.dtype(predict.dtype).itemsize
    if tile_n is None:
        tile_n = _pick_tile(n, c, itemsize)
    num_tiles = -(-n // tile_n)

    in_specs = [
        pl.BlockSpec((c, tile_n), lambda i: (0, i)),    # logits tile  (C, T)
        pl.BlockSpec((1, tile_n), lambda i: (0, i)),    # targets tile (1, T)
    ]
    out_bytes = 4 if reduction in ("mean", "sum") else n * 4
    cost = pl.CostEstimate(
        flops=int(n * (6 * c + 12)),
        transcendentals=int(n * (c + 2)),
        bytes_accessed=int(n * c * itemsize + n * 4 + out_bytes),
    )

    if reduction == "none":
        kernel = functools.partial(
            _focal_none_kernel, gamma=float(gamma), alpha=float(alpha),
            n_rows=n, tile_n=tile_n)
        out = pl.pallas_call(
            kernel,
            out_shape=jax.ShapeDtypeStruct((1, n), jnp.float32),
            grid=(num_tiles,),
            in_specs=in_specs,
            out_specs=pl.BlockSpec((1, tile_n), lambda i: (0, i)),
            compiler_params=pltpu.CompilerParams(
                dimension_semantics=("parallel",)),
            cost_estimate=cost,
        )(pred_t, tgt_row)
        return out.reshape(n, 1)        # matches the module's .view(-1, 1)

    if reduction not in ("mean", "sum"):
        raise ValueError(f"unsupported reduction: {reduction!r}")

    kernel = functools.partial(
        _focal_reduce_kernel, gamma=float(gamma), alpha=float(alpha),
        n_rows=n, tile_n=tile_n, mean=(reduction == "mean"))
    out = pl.pallas_call(
        kernel,
        out_shape=jax.ShapeDtypeStruct((1, 1), jnp.float32),
        grid=(num_tiles,),
        in_specs=in_specs,
        out_specs=pl.BlockSpec(memory_space=pltpu.MemorySpace.SMEM),
        scratch_shapes=[pltpu.VMEM((1, tile_n), jnp.float32)],
        compiler_params=pltpu.CompilerParams(
            dimension_semantics=("arbitrary",)),
        cost_estimate=cost,
    )(pred_t, tgt_row)
    return out[0, 0]


def _reference(predict, target, n_batch, gamma, alpha, reduction):
    pt = jax.nn.softmax(predict.astype(jnp.float32), axis=1)
    mask = jax.nn.one_hot(target, n_batch, dtype=jnp.float32)
    prob = jnp.sum(pt * mask, axis=1).reshape(-1, 1)
    loss = -alpha * jnp.power(1.0 - prob, gamma) * jnp.log(prob)
    if reduction == "mean":
        return jnp.mean(loss)
    if reduction == "sum":
        return jnp.sum(loss)
    return loss


if __name__ == "__main__":
    # Module config: n_batch (= number of classes / one_hot width) = 4,
    # gamma=2, alpha=0.25, reduction='mean'.
    n_batch = 4
    n_samples = 8

    key = jax.random.PRNGKey(0)
    k1, k2, k3, k4 = jax.random.split(key, 4)
    predict = jax.random.normal(k1, (n_samples, n_batch), dtype=jnp.float32)
    target = jax.random.randint(k2, (n_samples,), 0, n_batch, dtype=jnp.int32)

    # mean
    loss_mean = jax.block_until_ready(
        multi_ce_focal_loss(predict, target, gamma=2, alpha=0.25, reduction="mean"))
    ref_mean = _reference(predict, target, n_batch, 2.0, 0.25, "mean")
    assert jnp.allclose(loss_mean, ref_mean, rtol=1e-5, atol=1e-5), (loss_mean, ref_mean)

    # sum
    loss_sum = jax.block_until_ready(
        multi_ce_focal_loss(predict, target, gamma=2, alpha=0.25, reduction="sum"))
    ref_sum = _reference(predict, target, n_batch, 2.0, 0.25, "sum")
    assert jnp.allclose(loss_sum, ref_sum, rtol=1e-5, atol=1e-5), (loss_sum, ref_sum)

    # none (per-sample)
    loss_none = jax.block_until_ready(
        multi_ce_focal_loss(predict, target, gamma=2, alpha=0.25, reduction="none"))
    ref_none = _reference(predict, target, n_batch, 2.0, 0.25, "none")
    assert loss_none.shape == (n_samples, 1)
    assert jnp.allclose(loss_none, ref_none, rtol=1e-5, atol=1e-5)

    # Slightly larger ragged case exercising the tiled / accumulating path
    # (grid of 3 tiles of 128 with a masked tail).
    n_big = 300
    predict_b = jax.random.normal(k3, (n_big, n_batch), dtype=jnp.float32)
    target_b = jax.random.randint(k4, (n_big,), 0, n_batch, dtype=jnp.int32)
    loss_b = jax.block_until_ready(
        multi_ce_focal_loss(predict_b, target_b, gamma=2, alpha=0.25,
                            reduction="mean", tile_n=128))
    ref_b = _reference(predict_b, target_b, n_batch, 2.0, 0.25, "mean")
    assert jnp.allclose(loss_b, ref_b, rtol=1e-5, atol=1e-5), (loss_b, ref_b)

    print("KERNEL_OK")
</pallas_src>

<mosaic_0001>
module attributes {stable_mosaic.version = 11 : i64} {
  func.func @_focal_reduce_kernel(%arg0: i32, %arg1: memref<4x8xf32, #tpu.memory_space<vmem>>, %arg2: memref<1x8xi32, #tpu.memory_space<vmem>>, %arg3: memref<1x1xf32, #tpu.memory_space<smem>>, %arg4: memref<1x8xf32, #tpu.memory_space<vmem>>) attributes {dimension_semantics = [#tpu.dimension_semantics<arbitrary>], iteration_bounds = array<i64: 1>, scalar_prefetch = 0 : i64, scratch_operands = 1 : i64, tpu.core_type = #tpu.core_type<tc>, window_params = [{transform_indices = @transform_0, window_bounds = array<i64: 4, 8>}, {transform_indices = @transform_1, window_bounds = array<i64: 1, 8>}, {transform_indices = @transform_2, window_bounds = array<i64: 1, 1>}]} {
    %c0_i32 = arith.constant 0 : i32
    %0 = arith.cmpi eq, %arg0, %c0_i32 : i32
    %1 = arith.extui %0 : i1 to i32
    %c0_i32_0 = arith.constant 0 : i32
    %2 = arith.cmpi ne, %1, %c0_i32_0 : i32
    scf.if %2 {
      %cst_14 = arith.constant 0.000000e+00 : f32
      %36 = vector.broadcast %cst_14 : f32 to vector<1x8xf32>
      %c0_15 = arith.constant 0 : index
      %c0_16 = arith.constant 0 : index
      %37 = vector.load %arg4[%c0_15, %c0_16] : memref<1x8xf32, #tpu.memory_space<vmem>>, vector<1x8xf32>
      tpu.vector_store %arg4[%c0_15, %c0_16], %36 {strides = array<i32>} : memref<1x8xf32, #tpu.memory_space<vmem>>, vector<1x8xf32>,
    } else {
    }
    %c0 = arith.constant 0 : index
    %c0_1 = arith.constant 0 : index
    %3 = vector.load %arg1[%c0, %c0_1] : memref<4x8xf32, #tpu.memory_space<vmem>>, vector<4x8xf32>
    %c0_2 = arith.constant 0 : index
    %c0_3 = arith.constant 0 : index
    %4 = vector.load %arg2[%c0_2, %c0_3] : memref<1x8xi32, #tpu.memory_space<vmem>>, vector<1x8xi32>
    %cst = arith.constant dense<0xFF800000> : vector<8xf32>
    %5 = vector.multi_reduction <maximumf>, %3, %cst [0] : vector<4x8xf32> to vector<8xf32>
    %6 = vector.shape_cast %5 : vector<8xf32> to vector<1x8xf32>
    %7 = vector.broadcast %6 : vector<1x8xf32> to vector<4x8xf32>
    %8 = arith.subf %3, %7 : vector<4x8xf32>
    %9 = math.exp %8 : vector<4x8xf32>
    %cst_4 = arith.constant dense<0.000000e+00> : vector<8xf32>
    %10 = vector.multi_reduction <add>, %9, %cst_4 [0] : vector<4x8xf32> to vector<8xf32>
    %11 = vector.shape_cast %10 : vector<8xf32> to vector<1x8xf32>
    %12 = tpu.iota {dimensions = array<i32: 0>} : vector<4x8xi32>
    %13 = vector.broadcast %4 : vector<1x8xi32> to vector<4x8xi32>
    %14 = arith.cmpi eq, %12, %13 : vector<4x8xi32>
    %15 = arith.extui %14 : vector<4x8xi1> to vector<4x8xi32>
    %16 = arith.sitofp %15 : vector<4x8xi32> to vector<4x8xf32>
    %17 = arith.mulf %3, %16 : vector<4x8xf32>
    %cst_5 = arith.constant dense<0.000000e+00> : vector<8xf32>
    %18 = vector.multi_reduction <add>, %17, %cst_5 [0] : vector<4x8xf32> to vector<8xf32>
    %19 = vector.shape_cast %18 : vector<8xf32> to vector<1x8xf32>
    %20 = arith.subf %19, %6 : vector<1x8xf32>
    %21 = math.log %11 : vector<1x8xf32>
    %22 = arith.subf %20, %21 : vector<1x8xf32>
    %23 = math.exp %22 : vector<1x8xf32>
    %cst_6 = arith.constant 1.000000e+00 : f32
    %24 = vector.broadcast %cst_6 : f32 to vector<1x8xf32>
    %25 = arith.subf %24, %23 : vector<1x8xf32>
    %26 = arith.mulf %25, %25 : vector<1x8xf32>
    %cst_7 = arith.constant -2.500000e-01 : f32
    %27 = vector.broadcast %cst_7 : f32 to vector<1x8xf32>
    %28 = arith.mulf %27, %26 : vector<1x8xf32>
    %29 = arith.mulf %28, %22 : vector<1x8xf32>
    %c0_8 = arith.constant 0 : index
    %c0_9 = arith.constant 0 : index
    %30 = vector.load %arg4[%c0_8, %c0_9] : memref<1x8xf32, #tpu.memory_space<vmem>>, vector<1x8xf32>
    %31 = arith.addf %30, %29 : vector<1x8xf32>
    %c0_10 = arith.constant 0 : index
    %c0_11 = arith.constant 0 : index
    %32 = vector.load %arg4[%c0_10, %c0_11] : memref<1x8xf32, #tpu.memory_space<vmem>>, vector<1x8xf32>
    tpu.vector_store %arg4[%c0_10, %c0_11], %31 {strides = array<i32>} : memref<1x8xf32, #tpu.memory_space<vmem>>, vector<1x8xf32>,
    %c0_i32_12 = arith.constant 0 : i32
    %33 = arith.cmpi eq, %arg0, %c0_i32_12 : i32
    %34 = arith.extui %33 : i1 to i32
    %c0_i32_13 = arith.constant 0 : i32
    %35 = arith.cmpi ne, %34, %c0_i32_13 : i32
    scf.if %35 {
      %c0_14 = arith.constant 0 : index
      %c0_15 = arith.constant 0 : index
      %36 = vector.load %arg4[%c0_14, %c0_15] : memref<1x8xf32, #tpu.memory_space<vmem>>, vector<1x8xf32>
      %37 = vector.shape_cast %36 : vector<1x8xf32> to vector<1x1x8xf32>
      %cst_16 = arith.constant dense<0.000000e+00> : vector<1xf32>
      %38 = vector.multi_reduction <add>, %37, %cst_16 [1, 2] : vector<1x1x8xf32> to vector<1xf32>
      %39 = vector.shape_cast %38 : vector<1xf32> to vector<1x1x1xf32>
      %40 = vector.extract %39[0, 0, 0] : f32 from vector<1x1x1xf32>
      %cst_17 = arith.constant 8.000000e+00 : f32
      %41 = arith.divf %40, %cst_17 : f32
      %c0_18 = arith.constant 0 : index
      %c0_19 = arith.constant 0 : index
      %42 = memref.load %arg3[%c0_18, %c0_19] : memref<1x1xf32, #tpu.memory_space<smem>>
      memref.store %41, %arg3[%c0_18, %c0_19] : memref<1x1xf32, #tpu.memory_space<smem>>
    } else {
    }
    return
  }
  func.func @transform_0(%arg0: i32) -> (i32, i32) {
    %c0_i32 = arith.constant 0 : i32
    %c0_i32_0 = arith.constant 0 : i32
    return %c0_i32, %arg0 : i32, i32
  }
  func.func @transform_1(%arg0: i32) -> (i32, i32) {
    %c0_i32 = arith.constant 0 : i32
    %c0_i32_0 = arith.constant 0 : i32
    return %c0_i32, %arg0 : i32, i32
  }
  func.func @transform_2(%arg0: i32) -> (i32, i32) {
    %c0_i32 = arith.constant 0 : i32
    %c0_i32_0 = arith.constant 0 : i32
    %c0_i32_1 = arith.constant 0 : i32
    return %c0_i32, %c0_i32_0 : i32, i32
  }
}

</mosaic_0001>

<llo_original>
// kernel: tpu_custom_call.1
$region0: #{tpu_custom_call.1}
  #allocation0 [shape = 'u32[]', space=smem, size = 0x4, offset = 0x4, fixed_abs, tag = 'smem constant byte address 0x4 - core index']
  #allocation1 [shape = 'u32[144,128]{1,0:T(1,128)}', space=vmem, size = 0x12000, scoped, tag = 'internal scratch']
  #allocation2 [shape = 'f32[1,8]{1,0:T(1,128)}', space=vmem, size = 0x200, scoped, tag = 'scratch operand']
  %s0 = inlined_call_operand.hbm [shape: f32[4,8], index: 0, kind: input, shape index: {}]
  %s1 = inlined_call_operand.vmem [shape: s32[1,8], index: 1, kind: input, shape index: {}]
  %s2 = inlined_call_operand.hbm [shape: f32[1,1], index: 2, kind: output, shape index: {}]
  %s3 = sld [smem:[#allocation0]]
  $region30: #{tpu_custom_call.1} parent=0
    _
  %s5 = ssub.s32 1, %s3
  %s6 = scalar_select 0, %s5, %s3
  $region1: #{tpu_custom_call.1} parent=0
    #allocation3 [shape = 'u8[2048]{0}', space=vmem, size = 0x800, scoped, tag = 'input window, operand 0, single buffered']
    #allocation4 [shape = 's32[1]{0}', space=sflag, size = 0x4, scoped, tag = 'scoped memory for tpu_custom_call.1']
    #allocation5 [shape = 's32[1]{0}', space=sflag, size = 0x4, scoped, tag = 'scoped memory for tpu_custom_call.1']
    #allocation6 [shape = 'u8[512]{0}', space=smem, size = 0x200, scoped, tag = 'output window, operand 0, single buffered']
    %7 = vsyncpa [#allocation4], 0
    %8 = vsyncpa [#allocation5], 0
    // Predicated region
    $region2: #{tpu_custom_call.1} parent=1 // pred_check
      _
    $region3: #{tpu_custom_call.1} parent=1 // pred_check_branch
      %10 = sbr.rel (0) target = $region5
    $region4: #{tpu_custom_call.1} parent=1 // pred_region
      %s12 = ssub.s32 64, 64
      %13 = vsyncadd [#allocation4], %s12
      %s15 = sshll.u32 [#allocation3], 4
      %s16 = int_to_ptr.vmem [resolvable:$true] %s15
      %18 = dma.hbm_to_vmem [thread:$0]  %s0, 64, %s16, [#allocation4]
    $region5: #{tpu_custom_call.1} parent=1 // pred_fallthru
      _
    // Predicated region
    $region6: #{tpu_custom_call.1} parent=1 // pred_check
      _
    $region7: #{tpu_custom_call.1} parent=1 // pred_check_branch
      %20 = sbr.rel (0) target = $region9
    $region8: #{tpu_custom_call.1} parent=1 // pred_region
      _
    $region9: #{tpu_custom_call.1} parent=1 // pred_fallthru
      _
    // Predicated region
    $region10: #{tpu_custom_call.1} parent=1 // pred_check
      _
    $region11: #{tpu_custom_call.1} parent=1 // pred_check_branch
      %22 = sbr.rel (0) target = $region13
    $region12: #{tpu_custom_call.1} parent=1 // pred_region
      %23 = dma.done [#allocation4], 64
    $region13: #{tpu_custom_call.1} parent=1 // pred_fallthru
      _
    %p24 = scmp.eq.s32.totalorder 0, 0
    // Predicated region
    $region14: #{tpu_custom_call.1} parent=1 // pred_check
      %p25 = pneg %p24
    $region15: #{tpu_custom_call.1} parent=1 // pred_check_branch
      %27 = sbr.rel (%p25) target = $region17
    $region16: #{tpu_custom_call.1} parent=1 // pred_region
      %vm28 = vcmask 57344
      %29 = vst.msk [vmem:[#allocation2] sm:$0x1] %vm28, 0.0
    $region17: #{tpu_custom_call.1} parent=1 // pred_fallthru
      _
    %v30 = vld [vmem:[#allocation3] sm:$0xf]
    %v31 = vld [vmem:[%s1] sm:$0x1]
    %vm32 = vcmask 60416
    %v33 = vsel %vm32, %v30, -inf
    %v34 = vrot.slane %v33, 4
    %v35 = vmax.f32 %v33, %v34
    %v36 = vrot.slane %v35, 2
    %v37 = vmax.f32 %v35, %v36
    %v38 = vrot.slane %v37, 1
    %v39 = vmax.f32 %v37, %v38
    %v40 = vsub.f32 %v30, %v39
    %v41 = vmul.f32 %v40, 1.442695
    %v42 = vpow.pop %v41
    %v43 = vsel %vm32, %v42, 0.0
    %v44 = vrot.slane %v43, 4
    %v45 = vadd.f32 %v43, %v44
    %v46 = vrot.slane %v45, 2
    %v47 = vadd.f32 %v45, %v46
    %v48 = vrot.slane %v47, 1
    %v49 = vadd.f32 %v47, %v48
    %v50 = vlaneseq
    %v51 = vshrl.u32 %v50, 7
    %v52 = vlaneseq
    %v53 = vshrl.u32 %v52, 7
    %v54 = vsub.s32 0, %v53
    %v55 = vrot.slane %v31, %v54
    %vm56 = vcmp.eq.s32.totalorder %v51, %v55
    %v57 = vsel %vm56, 1, 0
    %v58 = vcvt.s32.f32 %v57
    %v59 = vmul.f32 %v30, %v58
    %v60 = vsel %vm32, %v59, 0.0
    %v61 = vrot.slane %v60, 4
    %v62 = vadd.f32 %v60, %v61
    %v63 = vrot.slane %v62, 2
    %v64 = vadd.f32 %v62, %v63
    %v65 = vrot.slane %v64, 1
    %v66 = vadd.f32 %v64, %v65
    %v67 = vsub.f32 %v66, %v39
    %v68 = vlog2.pop %v49
    %v69 = vmul.f32 %v68, 0.6931472
    %v70 = vsub.f32 %v67, %v69
    %v71 = vmul.f32 %v70, 1.442695
    %v72 = vpow.pop %v71
    %v73 = vsub.f32 1.0, %v72
    %v74 = vmul.f32 %v73, %v73
    %v75 = vmul.f32 %v74, -0.25
    %v76 = vmul.f32 %v75, %v70
    %v77 = vld [vmem:[#allocation2] sm:$0x1]
    %v78 = vadd.f32 %v77, %v76
    %vm79 = vcmask 57344
    %80 = vst.msk [vmem:[#allocation2] sm:$0x1] %vm79, %v78
    // Predicated region
    $region18: #{tpu_custom_call.1} parent=1 // pred_check
      %p81 = pneg %p24
    $region19: #{tpu_custom_call.1} parent=1 // pred_check_branch
      %83 = sbr.rel (%p81) target = $region21
    $region20: #{tpu_custom_call.1} parent=1 // pred_region
      %v84 = vld [vmem:[#allocation2] sm:$0x1]
      %v85 = vsel %vm79, %v84, 0.0
      %86 = vadd.xlane.f32.xlu0 %v85
      %v87 = vpop.xlane.xlu0 %86
      %v88 = vrot.slane %v87, 4
      %v89 = vadd.f32 %v87, %v88
      %v90 = vrot.slane %v89, 2
      %v91 = vadd.f32 %v89, %v90
      %v92 = vrot.slane %v91, 1
      %v93 = vadd.f32 %v91, %v92
      %s94 = vtos %v93
      %v95 = vrcp.pop 8.0
      %s96 = vtos %v95
      %s97 = smul.f32 %s94, %s96
      %s98 = scalar_lea.smem [#allocation6], 0
      %99 = sst [smem:[%s98]] %s97
    $region21: #{tpu_custom_call.1} parent=1 // pred_fallthru
      _
    // Predicated region
    $region22: #{tpu_custom_call.1} parent=1 // pred_check
      _
    $region23: #{tpu_custom_call.1} parent=1 // pred_check_branch
      %101 = sbr.rel (0) target = $region25
    $region24: #{tpu_custom_call.1} parent=1 // pred_region
      %s103 = ssub.s32 16, 16
      %104 = vsyncadd [#allocation5], %s103
      %107 = dma.smem_to_hbm [#allocation6], 16, %s2, [#allocation5]
    $region25: #{tpu_custom_call.1} parent=1 // pred_fallthru
      _
    // Predicated region
    $region26: #{tpu_custom_call.1} parent=1 // pred_check
      _
    $region27: #{tpu_custom_call.1} parent=1 // pred_check_branch
      %109 = sbr.rel (0) target = $region29
    $region28: #{tpu_custom_call.1} parent=1 // pred_region
      %110 = dma.done [#allocation5], 16
    $region29: #{tpu_custom_call.1} parent=1 // pred_fallthru
      _
    %111 = sfence
    %112 = vsyncpa [#allocation4], 1
    %113 = vsyncpa [#allocation5], 1

</llo_original>
